<compile_context>
chip_gen: v5e
topology: v5e:2x2
jax: 0.10.0
libtpu: 0.0.40
codegen_flags: <defaults>
</compile_context>

<pallas_src>
import functools

import numpy as np

import jax
import jax.numpy as jnp
from jax.experimental import pallas as pl
from jax.experimental.pallas import tpu as pltpu


def _focal_kernel(tgt_ref, x_ref, out_ref, acc_ref, *,
                  gamma, alpha, hw, tile, s_in, mask_tail):
    p = pl.program_id(1)          # spatial "parallel" split (v7x megacore)
    s = pl.program_id(2)          # spatial reduction steps within the split

    @pl.when(s == 0)
    def _():
        acc_ref[...] = jnp.zeros_like(acc_ref)

    x = x_ref[...].astype(jnp.float32)                    # (B, C, T)
    b, c, t = x.shape

    # log_softmax over the class (sublane) axis, per pixel (lane).
    m = jnp.max(x, axis=1, keepdims=True)                 # (B, 1, T)
    z = x - m
    lse = jnp.log(jnp.sum(jnp.exp(z), axis=1, keepdims=True))   # (B, 1, T)

    # Gather z[target] without materializing a one-hot (select then reduce);
    # saves an int->f32 convert and a (C,T) multiply per step.
    tgt = tgt_ref[...]                                     # (B, 1, T) int32
    cls = jax.lax.broadcasted_iota(jnp.int32, (b, c, t), 1)
    z_t = jnp.sum(jnp.where(cls == tgt, z, 0.0), axis=1, keepdims=True)
    logpt = z_t - lse                                      # (B, 1, T)
    pt = jnp.exp(logpt)

    # alpha gather: baked select chain on the (B,1,T) targets -- no (C,T)
    # broadcast and no class-axis reduction.
    if alpha is not None:
        at = jnp.full(tgt.shape, jnp.float32(alpha[0]))
        for ci in range(1, len(alpha)):
            at = jnp.where(tgt == ci, jnp.float32(alpha[ci]), at)
        logpt = logpt * at

    # Focal modulation (1-pt)**gamma; clamp guards fractional-gamma NaN when
    # exp rounds pt slightly above 1, integer gammas avoid the pow path.
    one_minus_pt = jnp.maximum(1.0 - pt, 0.0)
    if gamma == 0.0:
        loss = -logpt
    elif gamma == 1.0:
        loss = -(one_minus_pt * logpt)
    elif gamma == 2.0:
        loss = -((one_minus_pt * one_minus_pt) * logpt)
    else:
        loss = -((one_minus_pt ** jnp.float32(gamma)) * logpt)

    if mask_tail:
        # Lanes past H*W (partial last tile / fully padded tiles of the
        # spatial split) hold undefined data: select them away.
        g = p * s_in + s                                   # global tile index
        lane = jax.lax.broadcasted_iota(jnp.int32, (b, 1, t), 2)
        valid = (g * tile + lane) < hw
        loss = jnp.where(valid, loss, 0.0)

    # Lane-parallel accumulation: pure VPU add, no per-step XLU reduce or
    # SMEM scalar round-trip.
    acc_ref[...] += loss

    @pl.when(s == pl.num_programs(2) - 1)
    def _():
        out_ref[...] = jnp.full((1, 1, 128), jnp.sum(acc_ref[...]),
                                dtype=jnp.float32)


def focal_loss(x_nchw, target_nhw, *, gamma=0.0, alpha=None, size_average=True,
               vmem_block_budget_bytes=20 << 20, vmem_limit_bytes=48 << 20):
    """Forward pass of FocalLoss.

    x_nchw:     (N, C, H, W) float logits (any float dtype; upcast in-kernel)
    target_nhw: (N, H, W) integer class indices in [0, C)
    """
    N, C, H, W = x_nchw.shape
    HW = H * W

    # Free reshapes only -- no transpose, no pad, no dtype upcast in HBM.
    x3 = x_nchw.reshape(N, C, HW)
    tgt = target_nhw.reshape(N, 1, HW).astype(jnp.int32)

    # alpha handling (same rules as the module's __init__), baked as constants.
    if alpha is None:
        alpha_t = None
    elif isinstance(alpha, (float, int)):
        assert C == 2, "scalar alpha implies binary classification"
        alpha_t = (float(alpha), 1.0 - float(alpha))
    else:
        alpha_t = tuple(float(a) for a in
                        np.asarray(alpha, dtype=np.float64).reshape(-1))

    # VMEM bytes per pixel of spatial tile (sublane padding included):
    #   logits block (double-buffered, native dtype, C padded to 8 sublanes)
    # + target block (double-buffered int32, 1 row padded to 8 sublanes)
    # + f32 accumulator scratch (1 row padded to 8 sublanes)
    xb = jnp.dtype(x_nchw.dtype).itemsize
    cpad = ((C + 7) // 8) * 8
    per_pixel = 2 * cpad * xb + 2 * 8 * 4 + 8 * 4
    cap = max(128, (vmem_block_budget_bytes // per_pixel) // 128 * 128)

    if HW <= cap:
        tile, s_total = HW, 1
        # Small images: batch several samples per grid step so each DMA stays
        # large; keep >= 2 sample-blocks when N > 1 so both v7x cores get work.
        bmax = min(N, max(1, cap // max(HW, 1)))
        if N > 1:
            bmax = min(bmax, max(1, N // 2))
        b_n = next(b for b in range(bmax, 0, -1) if N % b == 0)
    else:
        b_n = 1
        # Balanced spatial tiles: pick S first so the last tile is not mostly
        # out-of-bounds, then round the tile up to a lane multiple.
        s_total = pl.cdiv(HW, cap)
        tile = pl.cdiv(pl.cdiv(HW, s_total), 128) * 128
        s_total = pl.cdiv(HW, tile)

    nb = N // b_n
    # Split the spatial reduction across a second "parallel" axis when the
    # sample axis alone cannot feed both v7x TensorCores (no-op on v5e/v6e).
    p_split = 2 if (nb == 1 and s_total >= 2) else 1
    s_in = pl.cdiv(s_total, p_split)
    mask_tail = (p_split * s_in * tile) != HW

    scale = (1.0 / (N * HW)) if size_average else 1.0
    last = s_total - 1

    kernel = functools.partial(_focal_kernel, gamma=float(gamma), alpha=alpha_t,
                               hw=HW, tile=tile, s_in=s_in, mask_tail=mask_tail)

    tgt_spec = pl.BlockSpec(
        (b_n, 1, tile),
        lambda n, p, s: (n, 0, jnp.minimum(p * s_in + s, last)))
    x_spec = pl.BlockSpec(
        (b_n, C, tile),
        lambda n, p, s: (n, 0, jnp.minimum(p * s_in + s, last)))
    out_spec = pl.BlockSpec((1, 1, 128),
                            lambda n, p, s: (n * p_split + p, 0, 0))

    partials = pl.pallas_call(
        kernel,
        out_shape=jax.ShapeDtypeStruct((nb * p_split, 1, 128), jnp.float32),
        grid_spec=pltpu.PrefetchScalarGridSpec(
            num_scalar_prefetch=0,
            grid=(nb, p_split, s_in),
            in_specs=[tgt_spec, x_spec],
            out_specs=out_spec,
            scratch_shapes=[pltpu.VMEM((b_n, 1, tile), jnp.float32)]),
        compiler_params=pltpu.CompilerParams(
            dimension_semantics=("parallel", "parallel", "arbitrary"),
            vmem_limit_bytes=vmem_limit_bytes),
    )(tgt, x3)

    return jnp.sum(partials[:, 0, 0]) * jnp.float32(scale)


def _focal_loss_ref(x_nchw, target_nhw, *, gamma, alpha, size_average):
    """Pure-JAX reference mirroring the PyTorch forward."""
    N, C, H, W = x_nchw.shape
    x2 = jnp.transpose(x_nchw, (0, 2, 3, 1)).reshape(-1, C).astype(jnp.float32)
    t = target_nhw.reshape(-1).astype(jnp.int32)
    logp = jax.nn.log_softmax(x2, axis=1)
    logpt = jnp.take_along_axis(logp, t[:, None], axis=1)[:, 0]
    pt = jnp.exp(logpt)
    if alpha is not None:
        if isinstance(alpha, (float, int)):
            a = jnp.array([float(alpha), 1.0 - float(alpha)], jnp.float32)
        else:
            a = jnp.asarray(alpha, jnp.float32)
        logpt = logpt * a[t]
    loss = -((1.0 - pt) ** gamma) * logpt
    return loss.mean() if size_average else loss.sum()


if __name__ == "__main__":
    key = jax.random.PRNGKey(0)
    kx, kt = jax.random.split(key)

    # Case 1: gamma=2, per-class alpha, mean reduction.
    N, C, H, W = 2, 4, 16, 16
    x = jax.random.normal(kx, (N, C, H, W), dtype=jnp.float32)
    target = jax.random.randint(kt, (N, H, W), 0, C, dtype=jnp.int32)
    alpha1 = [0.25, 0.75, 0.6, 0.4]
    out = jax.block_until_ready(
        focal_loss(x, target, gamma=2.0, alpha=alpha1, size_average=True))
    ref = _focal_loss_ref(x, target, gamma=2.0, alpha=alpha1,
                          size_average=True)
    assert jnp.allclose(out, ref, rtol=1e-5, atol=1e-5), (out, ref)

    # Case 2: gamma=0 (no focal modulation), no alpha, sum reduction.
    out2 = jax.block_until_ready(
        focal_loss(x, target, gamma=0.0, alpha=None, size_average=False))
    ref2 = _focal_loss_ref(x, target, gamma=0.0, alpha=None,
                           size_average=False)
    assert jnp.allclose(out2, ref2, rtol=1e-5, atol=1e-4), (out2, ref2)

    # Case 3: non-lane-multiple spatial size + tiny VMEM budget forces the
    # balanced-tiling + tail-mask + multi-step accumulation path.
    x3 = jax.random.normal(kx, (2, 4, 16, 17), dtype=jnp.float32)
    t3 = jax.random.randint(kt, (2, 16, 17), 0, 4, dtype=jnp.int32)
    out3 = jax.block_until_ready(
        focal_loss(x3, t3, gamma=2.0, alpha=alpha1, size_average=True,
                   vmem_block_budget_bytes=20 * 1024))
    ref3 = _focal_loss_ref(x3, t3, gamma=2.0, alpha=alpha1, size_average=True)
    assert jnp.allclose(out3, ref3, rtol=1e-5, atol=1e-5), (out3, ref3)

    # Case 4: N=1 with forced tiling exercises the spatial "parallel" split
    # (p_split=2) incl. the fully-masked padded tile, plus fractional gamma.
    x4 = jax.random.normal(kx, (1, 3, 16, 17), dtype=jnp.float32)
    t4 = jax.random.randint(kt, (1, 16, 17), 0, 3, dtype=jnp.int32)
    out4 = jax.block_until_ready(
        focal_loss(x4, t4, gamma=0.5, alpha=[0.2, 0.3, 0.5],
                   size_average=True, vmem_block_budget_bytes=20 * 1024))
    ref4 = _focal_loss_ref(x4, t4, gamma=0.5, alpha=[0.2, 0.3, 0.5],
                           size_average=True)
    assert jnp.allclose(out4, ref4, rtol=1e-5, atol=1e-5), (out4, ref4)

    # Case 5: small images -> several samples batched per grid step (b_n > 1).
    x5 = jax.random.normal(kx, (4, 4, 8, 8), dtype=jnp.float32)
    t5 = jax.random.randint(kt, (4, 8, 8), 0, 4, dtype=jnp.int32)
    out5 = jax.block_until_ready(
        focal_loss(x5, t5, gamma=2.0, alpha=None, size_average=True))
    ref5 = _focal_loss_ref(x5, t5, gamma=2.0, alpha=None, size_average=True)
    assert jnp.allclose(out5, ref5, rtol=1e-5, atol=1e-5), (out5, ref5)

    print("KERNEL_OK")
</pallas_src>

<mosaic_0001>
module attributes {stable_mosaic.version = 11 : i64} {
  func.func @_focal_kernel(%arg0: i32, %arg1: i32, %arg2: i32, %arg3: memref<1x1x256xi32, #tpu.memory_space<vmem>>, %arg4: memref<1x4x256xf32, #tpu.memory_space<vmem>>, %arg5: memref<1x1x128xf32, #tpu.memory_space<vmem>>, %arg6: memref<1x1x256xf32, #tpu.memory_space<vmem>>) attributes {dimension_semantics = [#tpu.dimension_semantics<parallel>, #tpu.dimension_semantics<parallel>, #tpu.dimension_semantics<arbitrary>], iteration_bounds = array<i64: 2, 1, 1>, scalar_prefetch = 0 : i64, scratch_operands = 1 : i64, tpu.core_type = #tpu.core_type<tc>, window_params = [{transform_indices = @transform_0, window_bounds = array<i64: 1, 1, 256>}, {transform_indices = @transform_1, window_bounds = array<i64: 1, 4, 256>}, {transform_indices = @transform_2, window_bounds = array<i64: 1, 1, 128>}]} {
    %c0_i32 = arith.constant 0 : i32
    %0 = arith.cmpi eq, %arg2, %c0_i32 : i32
    %1 = arith.extui %0 : i1 to i32
    %c0_i32_0 = arith.constant 0 : i32
    %2 = arith.cmpi ne, %1, %c0_i32_0 : i32
    scf.if %2 {
      %cst_24 = arith.constant 0.000000e+00 : f32
      %50 = vector.broadcast %cst_24 : f32 to vector<1x1x256xf32>
      %c0_25 = arith.constant 0 : index
      %c0_26 = arith.constant 0 : index
      %c0_27 = arith.constant 0 : index
      %51 = vector.load %arg6[%c0_25, %c0_26, %c0_27] : memref<1x1x256xf32, #tpu.memory_space<vmem>>, vector<1x1x256xf32>
      tpu.vector_store %arg6[%c0_25, %c0_26, %c0_27], %50 {strides = array<i32>} : memref<1x1x256xf32, #tpu.memory_space<vmem>>, vector<1x1x256xf32>,
    } else {
    }
    %c0 = arith.constant 0 : index
    %c0_1 = arith.constant 0 : index
    %c0_2 = arith.constant 0 : index
    %3 = vector.load %arg4[%c0, %c0_1, %c0_2] : memref<1x4x256xf32, #tpu.memory_space<vmem>>, vector<1x4x256xf32>
    %cst = arith.constant dense<0xFF800000> : vector<1x256xf32>
    %4 = vector.multi_reduction <maximumf>, %3, %cst [1] : vector<1x4x256xf32> to vector<1x256xf32>
    %5 = vector.shape_cast %4 : vector<1x256xf32> to vector<1x1x256xf32>
    %6 = vector.broadcast %5 : vector<1x1x256xf32> to vector<1x4x256xf32>
    %7 = arith.subf %3, %6 : vector<1x4x256xf32>
    %8 = math.exp %7 : vector<1x4x256xf32>
    %cst_3 = arith.constant dense<0.000000e+00> : vector<1x256xf32>
    %9 = vector.multi_reduction <add>, %8, %cst_3 [1] : vector<1x4x256xf32> to vector<1x256xf32>
    %10 = vector.shape_cast %9 : vector<1x256xf32> to vector<1x1x256xf32>
    %11 = math.log %10 : vector<1x1x256xf32>
    %c0_4 = arith.constant 0 : index
    %c0_5 = arith.constant 0 : index
    %c0_6 = arith.constant 0 : index
    %12 = vector.load %arg3[%c0_4, %c0_5, %c0_6] : memref<1x1x256xi32, #tpu.memory_space<vmem>>, vector<1x1x256xi32>
    %13 = tpu.iota {dimensions = array<i32: 1>} : vector<1x4x256xi32>
    %14 = vector.broadcast %12 : vector<1x1x256xi32> to vector<1x4x256xi32>
    %15 = arith.cmpi eq, %13, %14 : vector<1x4x256xi32>
    %cst_7 = arith.constant 0.000000e+00 : f32
    %16 = vector.broadcast %cst_7 : f32 to vector<1x4x256xf32>
    %17 = arith.select %15, %7, %16 : vector<1x4x256xi1>, vector<1x4x256xf32>
    %cst_8 = arith.constant dense<0.000000e+00> : vector<1x256xf32>
    %18 = vector.multi_reduction <add>, %17, %cst_8 [1] : vector<1x4x256xf32> to vector<1x256xf32>
    %19 = vector.shape_cast %18 : vector<1x256xf32> to vector<1x1x256xf32>
    %20 = arith.subf %19, %11 : vector<1x1x256xf32>
    %21 = math.exp %20 : vector<1x1x256xf32>
    %cst_9 = arith.constant 2.500000e-01 : f32
    %22 = vector.broadcast %cst_9 : f32 to vector<1x1x256xf32>
    %c1_i32 = arith.constant 1 : i32
    %23 = vector.broadcast %c1_i32 : i32 to vector<1x1x256xi32>
    %24 = arith.cmpi eq, %12, %23 : vector<1x1x256xi32>
    %cst_10 = arith.constant 7.500000e-01 : f32
    %25 = vector.broadcast %cst_10 : f32 to vector<1x1x256xf32>
    %26 = arith.select %24, %25, %22 : vector<1x1x256xi1>, vector<1x1x256xf32>
    %c2_i32 = arith.constant 2 : i32
    %27 = vector.broadcast %c2_i32 : i32 to vector<1x1x256xi32>
    %28 = arith.cmpi eq, %12, %27 : vector<1x1x256xi32>
    %cst_11 = arith.constant 6.000000e-01 : f32
    %29 = vector.broadcast %cst_11 : f32 to vector<1x1x256xf32>
    %30 = arith.select %28, %29, %26 : vector<1x1x256xi1>, vector<1x1x256xf32>
    %c3_i32 = arith.constant 3 : i32
    %31 = vector.broadcast %c3_i32 : i32 to vector<1x1x256xi32>
    %32 = arith.cmpi eq, %12, %31 : vector<1x1x256xi32>
    %cst_12 = arith.constant 4.000000e-01 : f32
    %33 = vector.broadcast %cst_12 : f32 to vector<1x1x256xf32>
    %34 = arith.select %32, %33, %30 : vector<1x1x256xi1>, vector<1x1x256xf32>
    %35 = arith.mulf %20, %34 : vector<1x1x256xf32>
    %cst_13 = arith.constant 1.000000e+00 : f32
    %36 = vector.broadcast %cst_13 : f32 to vector<1x1x256xf32>
    %37 = arith.subf %36, %21 : vector<1x1x256xf32>
    %cst_14 = arith.constant 0.000000e+00 : f32
    %38 = vector.broadcast %cst_14 : f32 to vector<1x1x256xf32>
    %39 = arith.maximumf %37, %38 : vector<1x1x256xf32>
    %40 = arith.mulf %39, %39 : vector<1x1x256xf32>
    %41 = arith.mulf %40, %35 : vector<1x1x256xf32>
    %cst_15 = arith.constant 0.000000e+00 : f32
    %42 = vector.broadcast %cst_15 : f32 to vector<1x1x256xf32>
    %43 = arith.subf %42, %41 : vector<1x1x256xf32>
    %c0_16 = arith.constant 0 : index
    %c0_17 = arith.constant 0 : index
    %c0_18 = arith.constant 0 : index
    %44 = vector.load %arg6[%c0_16, %c0_17, %c0_18] : memref<1x1x256xf32, #tpu.memory_space<vmem>>, vector<1x1x256xf32>
    %45 = arith.addf %44, %43 : vector<1x1x256xf32>
    %c0_19 = arith.constant 0 : index
    %c0_20 = arith.constant 0 : index
    %c0_21 = arith.constant 0 : index
    %46 = vector.load %arg6[%c0_19, %c0_20, %c0_21] : memref<1x1x256xf32, #tpu.memory_space<vmem>>, vector<1x1x256xf32>
    tpu.vector_store %arg6[%c0_19, %c0_20, %c0_21], %45 {strides = array<i32>} : memref<1x1x256xf32, #tpu.memory_space<vmem>>, vector<1x1x256xf32>,
    %c0_i32_22 = arith.constant 0 : i32
    %47 = arith.cmpi eq, %arg2, %c0_i32_22 : i32
    %48 = arith.extui %47 : i1 to i32
    %c0_i32_23 = arith.constant 0 : i32
    %49 = arith.cmpi ne, %48, %c0_i32_23 : i32
    scf.if %49 {
      %c0_24 = arith.constant 0 : index
      %c0_25 = arith.constant 0 : index
      %c0_26 = arith.constant 0 : index
      %50 = vector.load %arg6[%c0_24, %c0_25, %c0_26] : memref<1x1x256xf32, #tpu.memory_space<vmem>>, vector<1x1x256xf32>
      %51 = vector.shape_cast %50 : vector<1x1x256xf32> to vector<1x1x1x256xf32>
      %cst_27 = arith.constant dense<0.000000e+00> : vector<1xf32>
      %52 = vector.multi_reduction <add>, %51, %cst_27 [1, 2, 3] : vector<1x1x1x256xf32> to vector<1xf32>
      %53 = vector.shape_cast %52 : vector<1xf32> to vector<1x1x1x1xf32>
      %54 = vector.extract %53[0, 0, 0, 0] : f32 from vector<1x1x1x1xf32>
      %55 = vector.broadcast %54 : f32 to vector<1x1x128xf32>
      %c0_28 = arith.constant 0 : index
      %c0_29 = arith.constant 0 : index
      %c0_30 = arith.constant 0 : index
      %56 = vector.load %arg5[%c0_28, %c0_29, %c0_30] : memref<1x1x128xf32, #tpu.memory_space<vmem>>, vector<1x1x128xf32>
      tpu.vector_store %arg5[%c0_28, %c0_29, %c0_30], %55 {strides = array<i32>} : memref<1x1x128xf32, #tpu.memory_space<vmem>>, vector<1x1x128xf32>,
    } else {
    }
    return
  }
  func.func @transform_0(%arg0: i32, %arg1: i32, %arg2: i32) -> (i32, i32, i32) {
    %c1_i32 = arith.constant 1 : i32
    %0 = arith.muli %arg1, %c1_i32 : i32
    %1 = arith.addi %0, %arg2 : i32
    %c0_i32 = arith.constant 0 : i32
    %2 = arith.minsi %1, %c0_i32 : i32
    %c0_i32_0 = arith.constant 0 : i32
    %c0_i32_1 = arith.constant 0 : i32
    return %arg0, %c0_i32_0, %2 : i32, i32, i32
  }
  func.func @transform_1(%arg0: i32, %arg1: i32, %arg2: i32) -> (i32, i32, i32) {
    %c1_i32 = arith.constant 1 : i32
    %0 = arith.muli %arg1, %c1_i32 : i32
    %1 = arith.addi %0, %arg2 : i32
    %c0_i32 = arith.constant 0 : i32
    %2 = arith.minsi %1, %c0_i32 : i32
    %c0_i32_0 = arith.constant 0 : i32
    %c0_i32_1 = arith.constant 0 : i32
    return %arg0, %c0_i32_0, %2 : i32, i32, i32
  }
  func.func @transform_2(%arg0: i32, %arg1: i32, %arg2: i32) -> (i32, i32, i32) {
    %c1_i32 = arith.constant 1 : i32
    %0 = arith.muli %arg0, %c1_i32 : i32
    %1 = arith.addi %0, %arg1 : i32
    %c0_i32 = arith.constant 0 : i32
    %c0_i32_0 = arith.constant 0 : i32
    %c0_i32_1 = arith.constant 0 : i32
    return %1, %c0_i32, %c0_i32_0 : i32, i32, i32
  }
}

</mosaic_0001>

<llo_original>
// kernel: tpu_custom_call.1
$region0: #{tpu_custom_call.1}
  #allocation0 [shape = 'u32[]', space=smem, size = 0x4, offset = 0x4, fixed_abs, tag = 'smem constant byte address 0x4 - core index']
  #allocation1 [shape = 'u32[72,128]{1,0:T(1,128)}', space=vmem, size = 0x9000, scoped, tag = 'internal scratch']
  #allocation2 [shape = 'f32[1,1,256]{2,1,0:T(1,128)}', space=vmem, size = 0x400, scoped, tag = 'scratch operand']
  %s0 = inlined_call_operand.hbm [shape: s32[2,1,256], index: 0, kind: input, shape index: {}]
  %s1 = inlined_call_operand.hbm [shape: f32[2,4,256], index: 1, kind: input, shape index: {}]
  %s2 = inlined_call_operand.hbm [shape: f32[2,1,128], index: 2, kind: output, shape index: {}]
  %s3 = sld [smem:[#allocation0]]
  $region57: #{tpu_custom_call.1} parent=0
    _
  %s5 = ssub.s32 1, %s3
  %s6 = scalar_select 0, %s5, %s3
  $region1: #{tpu_custom_call.1} parent=0
    #allocation3 [shape = 'u8[2048]{0}', space=vmem, size = 0x800, scoped, tag = 'input window, operand 0']
    #allocation4 [shape = 's32[2]{0}', space=sflag, size = 0x8, scoped, tag = 'scoped memory for tpu_custom_call.1']
    #allocation5 [shape = 's32[2]{0}', space=sflag, size = 0x8, scoped, tag = 'scoped memory for tpu_custom_call.1']
    #allocation6 [shape = 'u8[8192]{0}', space=vmem, size = 0x2000, scoped, tag = 'input window, operand 1']
    #allocation7 [shape = 's32[2]{0}', space=sflag, size = 0x8, scoped, tag = 'scoped memory for tpu_custom_call.1']
    #allocation8 [shape = 'u8[1024]{0}', space=vmem, size = 0x400, scoped, tag = 'output window, operand 0']
    %7 = vsyncpa [#allocation4], 0
    %s8 = scalar_lea.sflag [#allocation4], 1
    %9 = vsyncpa %s8, 0
    %10 = vsyncpa [#allocation7], 0
    %s11 = scalar_lea.sflag [#allocation7], 1
    %12 = vsyncpa %s11, 0
    %13 = vsyncpa [#allocation5], 0
    %s14 = scalar_lea.sflag [#allocation5], 1
    %15 = vsyncpa %s14, 0
    loop: start=0, step=1, limit=4
    $region2: #{tpu_custom_call.1} parent=1 // loop_pre_header
      _
    $region3: #{tpu_custom_call.1} parent=1 // loop_header
      %s17 = sphi 0, %s21
      %p18 = scmp.ge.s32.totalorder %s17, 4
      %s24 = sphi 0, %s43
      %s25 = sphi 0, %s39
      %s26 = sphi 0, %s35
      %s27 = sphi 0, %s24
      %s28 = sphi 0, %s25
      %s29 = sphi 0, %s26
      %s30 = sphi 0, %s27
      %s31 = sphi 0, %s28
      %s32 = sphi 0, %s29
      %s54 = sphi 0, %s56
      %s57 = sphi 0, %s54
      %s58 = sphi 0, %s57
      %s74 = sphi 0, %s58
      %s88 = sphi 0, %s90
      %s91 = sphi 0, %s88
      %s92 = sphi 0, %s91
      %s108 = sphi 0, %s92
      %s116 = sphi 0, %s118
      %s119 = sphi 0, %s116
      %s120 = sphi 0, %s119
      %s136 = sphi 0, %s120
    $region4: #{tpu_custom_call.1} parent=1 // loop_header_branch
      %20 = sbr.rel (%p18) target = $region8
    $region5: #{tpu_custom_call.1} parent=1 // loop_body
      %s22 = ssub.s32 %s17, 1
      %s23 = ssub.s32 %s17, 2
      %s33 = sadd.s32 1, %s26
      %p34 = scmp.ge.s32.totalorder %s33, 1
      %s35 = scalar_select %p34, 0, %s33
      %s36 = sadd.s32 1, %s25
      %s37 = scalar_select %p34, %s36, %s25
      %p38 = scmp.ge.s32.totalorder %s37, 1
      %s39 = scalar_select %p38, 0, %s37
      %s40 = sadd.s32 1, %s24
      %s41 = scalar_select %p38, %s40, %s24
      %p42 = scmp.ge.s32.totalorder %s41, 2
      %s43 = scalar_select %p42, 0, %s41
      %s44 = sadd.s32 %s25, %s26
      %p45 = scmp.lt.s32.totalorder %s44, 0
      %s46 = scalar_select %p45, %s44, 0
      %s47 = sadd.s32 %s39, %s35
      %p48 = scmp.lt.s32.totalorder %s47, 0
      %s49 = scalar_select %p48, %s47, 0
      %s50 = ssub.s32 %s24, %s43
      %s51 = ssub.s32 %s46, %s49
      %s52 = sor.u32 %s50, %s51
      %p53 = scmp.eq.s32.totalorder %s52, 0
      %s55 = sadd.s32 %s54, 1
      %s56 = scalar_select %p53, %s54, %s55
      %p59 = pneg %p53
      %p60 = scmp.eq.s32.totalorder %s17, 1
      %p61 = por %p59, %p60
      %p62 = scmp.ne.s32.totalorder %s54, %s57
      %p63 = scmp.eq.s32.totalorder %s17, 0
      %p64 = por %p62, %p63
      %p65 = scmp.ne.s32.totalorder %s54, %s57
      %p66 = scmp.eq.s32.totalorder %s22, 1
      %p67 = por %p65, %p66
      %p68 = scmp.ne.s32.totalorder %s57, %s58
      %p69 = scmp.eq.s32.totalorder %s22, 0
      %p70 = por %p68, %p69
      %p71 = scmp.ne.s32.totalorder %s57, %s58
      %p72 = scmp.eq.s32.totalorder %s23, 1
      %p73 = por %p71, %p72
      %p75 = scmp.ne.s32.totalorder %s58, %s74
      %p76 = scmp.eq.s32.totalorder %s23, 0
      %p77 = por %p75, %p76
      %s78 = sadd.s32 %s25, %s26
      %p79 = scmp.lt.s32.totalorder %s78, 0
      %s80 = scalar_select %p79, %s78, 0
      %s81 = sadd.s32 %s39, %s35
      %p82 = scmp.lt.s32.totalorder %s81, 0
      %s83 = scalar_select %p82, %s81, 0
      %s84 = ssub.s32 %s24, %s43
      %s85 = ssub.s32 %s80, %s83
      %s86 = sor.u32 %s84, %s85
      %p87 = scmp.eq.s32.totalorder %s86, 0
      %s89 = sadd.s32 %s88, 1
      %s90 = scalar_select %p87, %s88, %s89
      %p93 = pneg %p87
      %p94 = scmp.eq.s32.totalorder %s17, 1
      %p95 = por %p93, %p94
      %p96 = scmp.ne.s32.totalorder %s88, %s91
      %p97 = scmp.eq.s32.totalorder %s17, 0
      %p98 = por %p96, %p97
      %p99 = scmp.ne.s32.totalorder %s88, %s91
      %p100 = scmp.eq.s32.totalorder %s22, 1
      %p101 = por %p99, %p100
      %p102 = scmp.ne.s32.totalorder %s91, %s92
      %p103 = scmp.eq.s32.totalorder %s22, 0
      %p104 = por %p102, %p103
      %p105 = scmp.ne.s32.totalorder %s91, %s92
      %p106 = scmp.eq.s32.totalorder %s23, 1
      %p107 = por %p105, %p106
      %p109 = scmp.ne.s32.totalorder %s92, %s108
      %p110 = scmp.eq.s32.totalorder %s23, 0
      %p111 = por %p109, %p110
      %s112 = sadd.s32 %s24, %s25
      %s113 = sadd.s32 %s43, %s39
      %s114 = ssub.s32 %s112, %s113
      %p115 = scmp.eq.s32.totalorder %s114, 0
      %s117 = sadd.s32 %s116, 1
      %s118 = scalar_select %p115, %s116, %s117
      %p121 = pneg %p115
      %p122 = scmp.eq.s32.totalorder %s17, 1
      %p123 = por %p121, %p122
      %p124 = scmp.ne.s32.totalorder %s116, %s119
      %p125 = scmp.eq.s32.totalorder %s17, 0
      %p126 = por %p124, %p125
      %p127 = scmp.ne.s32.totalorder %s116, %s119
      %p128 = scmp.eq.s32.totalorder %s22, 1
      %p129 = por %p127, %p128
      %p130 = scmp.ne.s32.totalorder %s119, %s120
      %p131 = scmp.eq.s32.totalorder %s22, 0
      %p132 = por %p130, %p131
      %p133 = scmp.ne.s32.totalorder %s119, %s120
      %p134 = scmp.eq.s32.totalorder %s23, 1
      %p135 = por %p133, %p134
      %p137 = scmp.ne.s32.totalorder %s120, %s136
      %p138 = scmp.eq.s32.totalorder %s23, 0
      %p139 = por %p137, %p138
      %p140 = scmp.le.s32.totalorder 1, %s17
      %p141 = scmp.lt.s32.totalorder %s17, 3
      %p142 = pnand %p140, %p141
      %p143 = pneg %p142
      // Predicated region
      $region9: #{tpu_custom_call.1} parent=5 // pred_check
        _
      $region10: #{tpu_custom_call.1} parent=5 // pred_check_branch
        %145 = sbr.rel (%p142) target = $region12
      $region11: #{tpu_custom_call.1} parent=5 // pred_region
        %s146 = ssub.s32 %s17, 1
      $region12: #{tpu_custom_call.1} parent=5 // pred_fallthru
        _
      %p147 = scmp.lt.s32.totalorder %s17, 2
      // Predicated region
      $region13: #{tpu_custom_call.1} parent=5 // pred_check
        %p148 = pneg %p147
      $region14: #{tpu_custom_call.1} parent=5 // pred_check_branch
        %150 = sbr.rel (%p148) target = $region16
      $region15: #{tpu_custom_call.1} parent=5 // pred_region
        // Predicated region
        $region17: #{tpu_custom_call.1} parent=15 // pred_check
          %p151 = pneg %p64
        $region18: #{tpu_custom_call.1} parent=15 // pred_check_branch
          %153 = sbr.rel (%p151) target = $region20
        $region19: #{tpu_custom_call.1} parent=15 // pred_region
          %s154 = sand.u32 %s54, 1
          %s155 = scalar_lea.sflag [#allocation4], %s154
          %s156 = sand.u32 %s54, 1
          %s157 = smul.addr %s156, 2
          %s158 = scalar_lea.vmem [#allocation3], %s157
          %s159 = sadd.s32 %s25, %s26
          %p160 = scmp.lt.s32.totalorder %s159, 0
          %s161 = scalar_select %p160, %s159, 0
          %s162 = smul.u32 2, %s161
          %164 = vsyncadd %s155, 0
          %s165 = smul.addr %s24, 2
          %s166 = sadd.s32 %s162, %s165
          %s167 = scalar_lea.hbm %s0, %s166
          %s169 = sshll.u32 %s167, 4
          %s170 = int_to_ptr.hbm [resolvable:$true] %s169
          %s171 = sshll.u32 %s158, 4
          %s172 = int_to_ptr.vmem [resolvable:$true] %s171
          %174 = dma.hbm_to_vmem [thread:$0]  %s170, 32, %s172, %s155
        $region20: #{tpu_custom_call.1} parent=15 // pred_fallthru
          _
        // Predicated region
        $region21: #{tpu_custom_call.1} parent=15 // pred_check
          %p175 = pneg %p98
        $region22: #{tpu_custom_call.1} parent=15 // pred_check_branch
          %177 = sbr.rel (%p175) target = $region24
        $region23: #{tpu_custom_call.1} parent=15 // pred_region
          %s178 = sand.u32 %s88, 1
          %s179 = scalar_lea.sflag [#allocation7], %s178
          %s180 = sand.u32 %s88, 1
          %s181 = smul.addr %s180, 8
          %s182 = scalar_lea.vmem [#allocation6], %s181
          %s183 = sadd.s32 %s25, %s26
          %p184 = scmp.lt.s32.totalorder %s183, 0
          %s185 = scalar_select %p184, %s183, 0
          %s186 = smul.u32 2, %s185
          %188 = vsyncadd %s179, 0
          %s189 = smul.addr %s24, 2
          %s190 = sadd.s32 %s186, %s189
          %s191 = smul.addr %s190, 4
          %s192 = scalar_lea.hbm %s1, %s191
          %s194 = sshll.u32 %s192, 4
          %s195 = int_to_ptr.hbm [resolvable:$true] %s194
          %s196 = sshll.u32 %s182, 4
          %s197 = int_to_ptr.vmem [resolvable:$true] %s196
          %199 = dma.hbm_to_vmem [thread:$0]  %s195, 128, %s197, %s179
        $region24: #{tpu_custom_call.1} parent=15 // pred_fallthru
          _
      $region16: #{tpu_custom_call.1} parent=5 // pred_fallthru
        _
      %p200 = scmp.le.s32.totalorder 1, %s17
      %p201 = scmp.lt.s32.totalorder %s17, 3
      %p202 = pnand %p200, %p201
      %p203 = pneg %p202
      // Predicated region
      $region25: #{tpu_custom_call.1} parent=5 // pred_check
        _
      $region26: #{tpu_custom_call.1} parent=5 // pred_check_branch
        %205 = sbr.rel (%p202) target = $region28
      $region27: #{tpu_custom_call.1} parent=5 // pred_region
        %s206 = ssub.s32 %s17, 1
        %s207 = sand.u32 %s57, 1
        %s208 = scalar_lea.sflag [#allocation4], %s207
        %s209 = sand.u32 %s57, 1
        %s210 = smul.addr %s209, 2
        %s211 = scalar_lea.vmem [#allocation3], %s210
        // Predicated region
        $region29: #{tpu_custom_call.1} parent=27 // pred_check
          %p212 = pneg %p70
        $region30: #{tpu_custom_call.1} parent=27 // pred_check_branch
          %214 = sbr.rel (%p212) target = $region32
        $region31: #{tpu_custom_call.1} parent=27 // pred_region
          %216 = dma.done %s208, 32
        $region32: #{tpu_custom_call.1} parent=27 // pred_fallthru
          _
        %s217 = sand.u32 %s91, 1
        %s218 = scalar_lea.sflag [#allocation7], %s217
        %s219 = sand.u32 %s91, 1
        %s220 = smul.addr %s219, 8
        %s221 = scalar_lea.vmem [#allocation6], %s220
        // Predicated region
        $region33: #{tpu_custom_call.1} parent=27 // pred_check
          %p222 = pneg %p104
        $region34: #{tpu_custom_call.1} parent=27 // pred_check_branch
          %224 = sbr.rel (%p222) target = $region36
        $region35: #{tpu_custom_call.1} parent=27 // pred_region
          %226 = dma.done %s218, 128
        $region36: #{tpu_custom_call.1} parent=27 // pred_fallthru
          _
        %s227 = sand.u32 %s57, 1
        %s228 = scalar_lea.sflag [#allocation4], %s227
        %s229 = sand.u32 %s57, 1
        %s230 = smul.addr %s229, 2
        %s231 = scalar_lea.vmem [#allocation3], %s230
        %p232 = pneg %p70
        %p233 = pneg %p67
        %s234 = sand.u32 %s91, 1
        %s235 = scalar_lea.sflag [#allocation7], %s234
        %s236 = sand.u32 %s91, 1
        %s237 = smul.addr %s236, 8
        %s238 = scalar_lea.vmem [#allocation6], %s237
        %p239 = pneg %p104
        %p240 = pneg %p101
        %p241 = pneg %p132
        %p242 = pneg %p129
        %s243 = sand.u32 %s119, 1
        %s244 = scalar_lea.sflag [#allocation5], %s243
        %s245 = sand.u32 %s119, 1
        %s246 = scalar_lea.vmem [#allocation8], %s245
        %s247 = sadd.s32 %s28, %s29
        %p248 = scmp.lt.s32.totalorder %s247, 0
        %s249 = scalar_select %p248, %s247, 0
        %s250 = smul.u32 2, %s249
        %s251 = sadd.s32 %s28, %s29
        %p252 = scmp.lt.s32.totalorder %s251, 0
        %s253 = scalar_select %p252, %s251, 0
        %s254 = smul.u32 2, %s253
        %s255 = sadd.s32 %s27, %s28
        %p256 = scmp.eq.s32.totalorder %s29, 0
        // Predicated region
        $region37: #{tpu_custom_call.1} parent=27 // pred_check
          %p257 = pneg %p256
        $region38: #{tpu_custom_call.1} parent=27 // pred_check_branch
          %259 = sbr.rel (%p257) target = $region40
        $region39: #{tpu_custom_call.1} parent=27 // pred_region
          %v260 = vlaneseq
          %vm261 = vcmp.ge.s32.totalorder %v260, 0
          %vm262 = vcmp.lt.s32.totalorder %v260, 256
          %vm263 = vmand %vm261, %vm262
          %264 = vst.msk [vmem:[#allocation2] sm:$0x3] %vm263, 0.0
        $region40: #{tpu_custom_call.1} parent=27 // pred_fallthru
          _
        %v265 = vld [vmem:[%s221] sm:$0xff]
        %267 = vst [vmem:[#allocation1] ss:$2 sm:$0xff] %v265
        %v268 = vld.sshfl [vmem:[#allocation1] sm:$0xff pattern:$0x75316420]
        %v269 = vld.sshfl [vmem:[#allocation1 + $0x8] sm:$0xff pattern:$0x75316420]
        %vm272 = vcmask 1043456
        %v273 = vsel %vm272, %v268, -inf
        %v274 = vrot.slane %v273, 4
        %v275 = vmax.f32 %v273, %v274
        %v276 = vrot.slane %v275, 2
        %v277 = vmax.f32 %v275, %v276
        %v278 = vrot.slane %v277, 1
        %v279 = vmax.f32 %v277, %v278
        %v280 = vsel %vm272, %v269, -inf
        %v281 = vrot.slane %v280, 4
        %v282 = vmax.f32 %v280, %v281
        %v283 = vrot.slane %v282, 2
        %v284 = vmax.f32 %v282, %v283
        %v285 = vrot.slane %v284, 1
        %v286 = vmax.f32 %v284, %v285
        %v289 = vrot.slane %v286, 4
        %v290 = vsel %vm272, %v279, %v289
        %v292 = vsub.f32 %v265, %v290
        %v293 = vmul.f32 %v292, 1.442695
        %v294 = vpow.pop %v293
        %296 = vst [vmem:[#allocation1] ss:$2 sm:$0xff] %v294
        %v297 = vld.sshfl [vmem:[#allocation1] sm:$0xff pattern:$0x75316420]
        %v298 = vld.sshfl [vmem:[#allocation1 + $0x8] sm:$0xff pattern:$0x75316420]
        %v301 = vsel %vm272, %v297, 0.0
        %v302 = vrot.slane %v301, 4
        %v303 = vadd.f32 %v301, %v302
        %v304 = vrot.slane %v303, 2
        %v305 = vadd.f32 %v303, %v304
        %v306 = vrot.slane %v305, 1
        %v307 = vadd.f32 %v305, %v306
        %v308 = vsel %vm272, %v298, 0.0
        %v309 = vrot.slane %v308, 4
        %v310 = vadd.f32 %v308, %v309
        %v311 = vrot.slane %v310, 2
        %v312 = vadd.f32 %v310, %v311
        %v313 = vrot.slane %v312, 1
        %v314 = vadd.f32 %v312, %v313
        %v315 = vlog2.pop %v307
        %v316 = vmul.f32 %v315, 0.6931472
        %v317 = vlog2.pop %v314
        %v318 = vmul.f32 %v317, 0.6931472
        %v319 = vld [vmem:[%s211] sm:$0x3]
        %v320 = vlaneseq
        %v321 = vshrl.u32 %v320, 7
        %v322 = vperm.slane %v319, 0
        %v323 = vperm.slane %v319, 1
        %vm324 = vcmp.eq.s32.totalorder %v321, %v322
        %vm325 = vcmp.eq.s32.totalorder %v321, %v323
        %327 = vst [vmem:[#allocation1] ss:$2 sm:$0xff] %v292
        %v328 = vld.sshfl [vmem:[#allocation1] sm:$0xff pattern:$0x75316420]
        %v329 = vld.sshfl [vmem:[#allocation1 + $0x8] sm:$0xff pattern:$0x75316420]
        %v332 = vsel %vm324, %v328, 0.0
        %v333 = vsel %vm325, %v329, 0.0
        %v334 = vsel %vm272, %v332, 0.0
        %v335 = vrot.slane %v334, 4
        %v336 = vadd.f32 %v334, %v335
        %v337 = vrot.slane %v336, 2
        %v338 = vadd.f32 %v336, %v337
        %v339 = vrot.slane %v338, 1
        %v340 = vadd.f32 %v338, %v339
        %v341 = vsel %vm272, %v333, 0.0
        %v342 = vrot.slane %v341, 4
        %v343 = vadd.f32 %v341, %v342
        %v344 = vrot.slane %v343, 2
        %v345 = vadd.f32 %v343, %v344
        %v346 = vrot.slane %v345, 1
        %v347 = vadd.f32 %v345, %v346
        %v348 = vsub.f32 %v340, %v316
        %v349 = vsub.f32 %v347, %v318
        %v350 = vmul.f32 %v348, 1.442695
        %v351 = vpow.pop %v350
        %v352 = vmul.f32 %v349, 1.442695
        %v353 = vpow.pop %v352
        %vm354 = vcmp.eq.s32.totalorder %v319, 1
        %v355 = vsel %vm354, 0.75, 0.25
        %vm356 = vcmp.eq.s32.totalorder %v319, 2
        %v357 = vsel %vm356, 0.6, %v355
        %vm358 = vcmp.eq.s32.totalorder %v319, 3
        %v359 = vsel %vm358, 0.4, %v357
        %v361 = vperm.slane %v359, 0
        %v362 = vperm.slane %v359, 1
        %v365 = vmul.f32 %v348, %v361
        %v366 = vmul.f32 %v349, %v362
        %v367 = vsub.f32 1.0, %v351
        %v368 = vsub.f32 1.0, %v353
        %v369 = vmax.f32 %v367, 0.0
        %v370 = vmax.f32 %v368, 0.0
        %v371 = vmul.f32 %v369, %v369
        %v372 = vmul.f32 %v370, %v370
        %v373 = vmul.f32 %v371, %v365
        %v374 = vmul.f32 %v372, %v366
        %v375 = vsub.f32 0.0, %v373
        %v376 = vsub.f32 0.0, %v374
        %v377 = vld [vmem:[#allocation2] sm:$0x3]
        %v380 = vrot.slane %v376, 7
        %vm381 = vcmask 1040384
        %v382 = vsel %vm381, %v375, %v380
        %v384 = vadd.f32 %v377, %v382
        %v385 = vlaneseq
        %vm386 = vcmp.ge.s32.totalorder %v385, 0
        %vm387 = vcmp.lt.s32.totalorder %v385, 256
        %vm388 = vmand %vm386, %vm387
        %389 = vst.msk [vmem:[#allocation2] sm:$0x3] %vm388, %v384
        // Predicated region
        $region41: #{tpu_custom_call.1} parent=27 // pred_check
          %p390 = pneg %p256
        $region42: #{tpu_custom_call.1} parent=27 // pred_check_branch
          %392 = sbr.rel (%p390) target = $region44
        $region43: #{tpu_custom_call.1} parent=27 // pred_region
          %v393 = vld [vmem:[#allocation2] sm:$0x3]
          %v395 = vperm.slane %v393, 0
          %v396 = vperm.slane %v393, 1
          %v399 = vsel %vm381, %v395, 0.0
          %v400 = vsel %vm381, %v396, 0.0
          %v401 = vadd.f32 %v399, %v400
          %402 = vadd.xlane.f32.xlu0 %v401
          %v403 = vpop.xlane.xlu0 %402
          %v404 = vrot.slane %v403, 4
          %v405 = vadd.f32 %v403, %v404
          %v406 = vrot.slane %v405, 2
          %v407 = vadd.f32 %v405, %v406
          %v408 = vrot.slane %v407, 1
          %v409 = vadd.f32 %v407, %v408
          %s410 = vtos %v409
          %v411 = vstv %s410
          %412 = vst [vmem:[%s246] sm:$0x1] %v411
        $region44: #{tpu_custom_call.1} parent=27 // pred_fallthru
          _
        %s413 = sand.u32 %s119, 1
        %s414 = scalar_lea.sflag [#allocation5], %s413
        %s415 = sand.u32 %s119, 1
        %s416 = scalar_lea.vmem [#allocation8], %s415
        // Predicated region
        $region45: #{tpu_custom_call.1} parent=27 // pred_check
          %p417 = pneg %p129
        $region46: #{tpu_custom_call.1} parent=27 // pred_check_branch
          %419 = sbr.rel (%p417) target = $region48
        $region47: #{tpu_custom_call.1} parent=27 // pred_region
          %s420 = sadd.s32 %s27, %s28
          %422 = vsyncadd %s414, 0
          %s423 = scalar_lea.hbm %s2, %s420
          %s425 = sshll.u32 %s416, 4
          %s426 = int_to_ptr.vmem [resolvable:$true] %s425
          %s427 = sshll.u32 %s423, 4
          %s428 = int_to_ptr.hbm [resolvable:$true] %s427
          %430 = dma.vmem_to_hbm [thread:$0]  %s426, 16, %s428, %s414
        $region48: #{tpu_custom_call.1} parent=27 // pred_fallthru
          _
      $region28: #{tpu_custom_call.1} parent=5 // pred_fallthru
        _
      %p431 = scmp.le.s32.totalorder 2, %s17
      // Predicated region
      $region49: #{tpu_custom_call.1} parent=5 // pred_check
        %p432 = pneg %p431
      $region50: #{tpu_custom_call.1} parent=5 // pred_check_branch
        %434 = sbr.rel (%p432) target = $region52
      $region51: #{tpu_custom_call.1} parent=5 // pred_region
        %s435 = ssub.s32 %s17, 2
        // Predicated region
        $region53: #{tpu_custom_call.1} parent=51 // pred_check
          %p436 = pneg %p135
        $region54: #{tpu_custom_call.1} parent=51 // pred_check_branch
          %438 = sbr.rel (%p436) target = $region56
        $region55: #{tpu_custom_call.1} parent=51 // pred_region
          %s439 = sand.u32 %s120, 1
          %s440 = scalar_lea.sflag [#allocation5], %s439
          %s441 = sand.u32 %s120, 1
          %s442 = scalar_lea.vmem [#allocation8], %s441
          %444 = dma.done %s440, 16
        $region56: #{tpu_custom_call.1} parent=51 // pred_fallthru
          _
      $region52: #{tpu_custom_call.1} parent=5 // pred_fallthru
        _
    $region6: #{tpu_custom_call.1} parent=1 // loop_footer
      %s21 = sadd.s32 1, %s17
    $region7: #{tpu_custom_call.1} parent=1 // loop_footer_branch
      %16 = sbr.rel target = $region3
    $region8: #{tpu_custom_call.1} parent=1 // loop_exit
      _
    %445 = vsyncpa [#allocation4], 1
    %s446 = scalar_lea.sflag [#allocation4], 1
    %447 = vsyncpa %s446, 1
    %448 = vsyncpa [#allocation7], 1
    %s449 = scalar_lea.sflag [#allocation7], 1
    %450 = vsyncpa %s449, 1
    %451 = vsyncpa [#allocation5], 1
    %s452 = scalar_lea.sflag [#allocation5], 1
    %453 = vsyncpa %s452, 1

</llo_original>
